<compile_context>
chip_gen: v6e
topology: v6e:2x2x1
jax: 0.10.0
libtpu: 0.0.40
codegen_flags: <defaults>
</compile_context>

<pallas_src>
import jax
import jax.numpy as jnp
from jax.experimental import pallas as pl
from jax.experimental.pallas import tpu as pltpu

LN_EPS = 1e-5


def _round_up(v, m):
    return (v + m - 1) // m * m


def _layer_norm_rows(z):
    # z: (tm, d_model) f32. gamma=1, beta=0, biased variance.
    mean = jnp.mean(z, axis=-1, keepdims=True)
    centered = z - mean
    var = jnp.mean(centered * centered, axis=-1, keepdims=True)
    return centered * jax.lax.rsqrt(var + LN_EPS)


# --------------------------------------------------------------------------
# Fast path: W1/W2 fully VMEM-resident, grid = (row tiles,)
# --------------------------------------------------------------------------
def ffn_resident_kernel(x_ref, w1_ref, w2_ref, o_ref):
    x = x_ref[...]                                              # (tm, d_model)
    h = jnp.dot(x, w1_ref[...], preferred_element_type=jnp.float32)
    h = jnp.maximum(h.astype(w2_ref.dtype), 0)                  # ReLU in weight dtype
    y = jnp.dot(h, w2_ref[...], preferred_element_type=jnp.float32)
    z = x.astype(jnp.float32) + y                               # residual
    o_ref[...] = _layer_norm_rows(z).astype(o_ref.dtype)


# --------------------------------------------------------------------------
# Streaming path: W1/W2 chunked along d_ff, grid = (row tiles, k tiles)
# --------------------------------------------------------------------------
def ffn_stream_kernel(x_ref, w1_ref, w2_ref, o_ref, acc_ref):
    # x_ref : (tm, d_model)   row tile (constant across the k axis)
    # w1_ref: (d_model, tk)   k-th column-chunk of W1
    # w2_ref: (tk, d_model)   k-th row-chunk of W2
    # acc_ref: (tm, d_model)  f32 accumulator for fc2 partial sums
    k = pl.program_id(1)
    nk = pl.num_programs(1)

    @pl.when(k == 0)
    def _():
        acc_ref[...] = jnp.zeros_like(acc_ref)

    x = x_ref[...]
    h = jnp.dot(x, w1_ref[...], preferred_element_type=jnp.float32)
    h = jnp.maximum(h.astype(w2_ref.dtype), 0)
    partial = jnp.dot(h, w2_ref[...], preferred_element_type=jnp.float32)

    is_last = k == nk - 1

    @pl.when(jnp.logical_not(is_last))
    def _():
        acc_ref[...] += partial

    @pl.when(is_last)
    def _():
        # Fold the final partial directly (saves one acc store+reload).
        z = x.astype(jnp.float32) + acc_ref[...] + partial
        o_ref[...] = _layer_norm_rows(z).astype(o_ref.dtype)


# --------------------------------------------------------------------------
# Wrapper
# --------------------------------------------------------------------------
def _pick_tk(d_ff, tk_req):
    """Largest multiple of 128 that divides d_ff and is <= tk_req.

    Falls back to d_ff only when no such divisor exists (small / odd d_ff,
    which is normally handled by the weights-resident path anyway)."""
    best = 0
    c = 128
    lim = min(tk_req, d_ff)
    while c <= lim:
        if d_ff % c == 0:
            best = c
        c += 128
    return best if best else d_ff


def poswise_ffn(x, w1, w2, *, tm=None, tk=None, force_stream=False):
    """x: [batch, seq, d_model]; w1: [d_model, d_ff]; w2: [d_ff, d_model]."""
    b, s, d_model = x.shape
    d_ff = w1.shape[1]
    assert w1.shape == (d_model, d_ff) and w2.shape == (d_ff, d_model)
    n = b * s
    x2d = x.reshape(n, d_model)

    isz_x = jnp.dtype(x.dtype).itemsize
    isz_w = jnp.dtype(w1.dtype).itemsize

    # ---- generation-aware VMEM budget -------------------------------------
    try:
        info = pltpu.get_tpu_info()
        vmem_cap = int(getattr(info, "vmem_capacity_bytes", 64 << 20))
    except Exception:
        vmem_cap = 64 << 20                      # conservative: v7x per-TC VMEM
    vmem_budget = max(vmem_cap - (8 << 20), 16 << 20)   # headroom for scratch
    big_vmem = vmem_cap >= (100 << 20)           # v5e/v6e (128 MiB) vs v7x (64 MiB)

    if tm is None:
        tm = 512 if big_vmem else 256
    if tk is None:
        tk = 512 if big_vmem else 256

    tm = _round_up(min(tm, _round_up(n, 8)), 8)
    grid_rows = pl.cdiv(n, tm)

    weight_bytes = (w1.size + w2.size) * isz_w

    # ---- weights-resident fast path ----------------------------------------
    # 2x weights (pipeline buffers) + double-buffered x/out tiles + fc1
    # intermediate (f32 + weight-dtype copies).
    resident_bytes = (2 * weight_bytes
                      + 2 * 2 * tm * d_model * isz_x
                      + tm * d_ff * (4 + isz_w))
    use_resident = (not force_stream) and resident_bytes <= vmem_budget

    if use_resident:
        cost = pl.CostEstimate(
            flops=4 * n * d_model * d_ff,
            transcendentals=n,
            bytes_accessed=2 * n * d_model * isz_x + weight_bytes,
        )
        out2d = pl.pallas_call(
            ffn_resident_kernel,
            out_shape=jax.ShapeDtypeStruct((n, d_model), x.dtype),
            grid_spec=pltpu.PrefetchScalarGridSpec(
                num_scalar_prefetch=0,
                grid=(grid_rows,),
                in_specs=[
                    pl.BlockSpec((tm, d_model), lambda i: (i, 0)),
                    pl.BlockSpec((d_model, d_ff), lambda i: (0, 0)),   # resident
                    pl.BlockSpec((d_ff, d_model), lambda i: (0, 0)),   # resident
                ],
                out_specs=pl.BlockSpec((tm, d_model), lambda i: (i, 0)),
            ),
            compiler_params=pltpu.CompilerParams(
                dimension_semantics=("parallel",),
                vmem_limit_bytes=int(vmem_budget),
            ),
            cost_estimate=cost,
        )(x2d, w1, w2)
        return out2d.reshape(b, s, d_model)

    # ---- streaming path (weights chunked along d_ff) ------------------------
    tk = _pick_tk(d_ff, tk)

    def stream_bytes(tm_, tk_):
        return (2 * (tm_ * d_model * isz_x          # x tile (double-buffered)
                     + d_model * tk_ * isz_w        # W1 chunk
                     + tk_ * d_model * isz_w        # W2 chunk
                     + tm_ * d_model * isz_x)       # out tile
                + tm_ * d_model * 4                 # f32 accumulator
                + tm_ * tk_ * (4 + isz_w))          # fc1 intermediate

    # Shrink tk first (preserves tm-driven weight reuse), then tm.
    while (stream_bytes(tm, tk) > vmem_budget and tk > 128
           and (tk // 2) % 128 == 0 and d_ff % (tk // 2) == 0):
        tk //= 2
    while stream_bytes(tm, tk) > vmem_budget and tm > 8:
        tm = max(8, _round_up(tm // 2, 8))
    grid_rows = pl.cdiv(n, tm)
    nk = d_ff // tk

    cost = pl.CostEstimate(
        flops=4 * n * d_model * d_ff,
        transcendentals=n,
        # Weights are re-streamed once per row tile.
        bytes_accessed=2 * n * d_model * isz_x + grid_rows * weight_bytes,
    )

    out2d = pl.pallas_call(
        ffn_stream_kernel,
        out_shape=jax.ShapeDtypeStruct((n, d_model), x.dtype),
        grid_spec=pltpu.PrefetchScalarGridSpec(
            num_scalar_prefetch=0,
            grid=(grid_rows, nk),
            in_specs=[
                pl.BlockSpec((tm, d_model), lambda i, k: (i, 0)),
                pl.BlockSpec((d_model, tk), lambda i, k: (0, k)),
                pl.BlockSpec((tk, d_model), lambda i, k: (k, 0)),
            ],
            out_specs=pl.BlockSpec((tm, d_model), lambda i, k: (i, 0)),
            scratch_shapes=[pltpu.VMEM((tm, d_model), jnp.float32)],
        ),
        compiler_params=pltpu.CompilerParams(
            dimension_semantics=("parallel", "arbitrary"),
            vmem_limit_bytes=int(vmem_budget),
        ),
        cost_estimate=cost,
    )(x2d, w1, w2)
    return out2d.reshape(b, s, d_model)


# --------------------------------------------------------------------------
# Reference (pure JAX)
# --------------------------------------------------------------------------
def reference(x, w1, w2):
    x32 = x.astype(jnp.float32)
    h = jnp.maximum(x32 @ w1.astype(jnp.float32), 0.0)
    y = h @ w2.astype(jnp.float32)
    z = x32 + y
    mean = jnp.mean(z, axis=-1, keepdims=True)
    var = jnp.mean((z - mean) ** 2, axis=-1, keepdims=True)
    return ((z - mean) * jax.lax.rsqrt(var + LN_EPS)).astype(x.dtype)


if __name__ == "__main__":
    key = jax.random.PRNGKey(0)
    keys = jax.random.split(key, 12)

    # --- 1) small shapes matching the module's forward ----------------------
    batch, seq, d_model, d_ff = 2, 8, 32, 64
    x = jax.random.normal(keys[0], (batch, seq, d_model), dtype=jnp.float32)
    w1 = jax.random.normal(keys[1], (d_model, d_ff), dtype=jnp.float32) * (d_model ** -0.5)
    w2 = jax.random.normal(keys[2], (d_ff, d_model), dtype=jnp.float32) * (d_ff ** -0.5)

    out = jax.block_until_ready(poswise_ffn(x, w1, w2))
    ref = reference(x, w1, w2)
    assert out.shape == (batch, seq, d_model)
    assert jnp.allclose(out, ref, atol=1e-5, rtol=1e-5)

    # --- 2) MXU-aligned shapes: weights-resident fast path -------------------
    b2, s2, dm2, dff2 = 4, 128, 128, 1024
    x_b = jax.random.normal(keys[3], (b2, s2, dm2), dtype=jnp.float32)
    w1_b = jax.random.normal(keys[4], (dm2, dff2), dtype=jnp.float32) * (dm2 ** -0.5)
    w2_b = jax.random.normal(keys[5], (dff2, dm2), dtype=jnp.float32) * (dff2 ** -0.5)

    out_b = jax.block_until_ready(poswise_ffn(x_b, w1_b, w2_b))
    ref_b = reference(x_b, w1_b, w2_b)
    assert out_b.shape == (b2, s2, dm2)
    assert jnp.allclose(out_b, ref_b, atol=1e-4, rtol=1e-4)

    # --- 3) same shapes, forced streaming path (d_ff chunks + accumulator) ---
    out_s = jax.block_until_ready(
        poswise_ffn(x_b, w1_b, w2_b, tk=256, force_stream=True))
    assert jnp.allclose(out_s, ref_b, atol=1e-4, rtol=1e-4)

    # --- 4) ragged row count (no host-side padding; masked partial blocks) ---
    b3, s3, dm3, dff3 = 3, 5, 64, 128           # n = 15 rows, tm = 8 -> ragged tail
    x_r = jax.random.normal(keys[6], (b3, s3, dm3), dtype=jnp.float32)
    w1_r = jax.random.normal(keys[7], (dm3, dff3), dtype=jnp.float32) * (dm3 ** -0.5)
    w2_r = jax.random.normal(keys[8], (dff3, dm3), dtype=jnp.float32) * (dff3 ** -0.5)

    out_r = jax.block_until_ready(poswise_ffn(x_r, w1_r, w2_r, tm=8))
    ref_r = reference(x_r, w1_r, w2_r)
    assert out_r.shape == (b3, s3, dm3)
    assert jnp.allclose(out_r, ref_r, atol=1e-4, rtol=1e-4)

    print("KERNEL_OK")
</pallas_src>

<mosaic_0001>
module attributes {stable_mosaic.version = 11 : i64} {
  func.func @ffn_resident_kernel(%arg0: i32, %arg1: memref<16x32xf32, #tpu.memory_space<vmem>>, %arg2: memref<32x64xf32, #tpu.memory_space<vmem>>, %arg3: memref<64x32xf32, #tpu.memory_space<vmem>>, %arg4: memref<16x32xf32, #tpu.memory_space<vmem>>) attributes {dimension_semantics = [#tpu.dimension_semantics<parallel>], iteration_bounds = array<i64: 1>, scalar_prefetch = 0 : i64, scratch_operands = 0 : i64, tpu.core_type = #tpu.core_type<tc>, window_params = [{transform_indices = @transform_0, window_bounds = array<i64: 16, 32>}, {pipeline_mode = #tpu.pipeline_mode<synchronous>, transform_indices = @transform_1, window_bounds = array<i64: 32, 64>}, {pipeline_mode = #tpu.pipeline_mode<synchronous>, transform_indices = @transform_2, window_bounds = array<i64: 64, 32>}, {transform_indices = @transform_3, window_bounds = array<i64: 16, 32>}]} {
    %c0 = arith.constant 0 : index
    %c0_0 = arith.constant 0 : index
    %0 = vector.load %arg1[%c0, %c0_0] : memref<16x32xf32, #tpu.memory_space<vmem>>, vector<16x32xf32>
    %c0_1 = arith.constant 0 : index
    %c0_2 = arith.constant 0 : index
    %1 = vector.load %arg2[%c0_1, %c0_2] : memref<32x64xf32, #tpu.memory_space<vmem>>, vector<32x64xf32>
    %cst = arith.constant dense<0.000000e+00> : vector<16x64xf32>
    %2 = tpu.matmul %0, %1, %cst {dimension_numbers = #tpu.dot_dimension_numbers<[1], [0], [0], [1], [0, 0, 1, 1], [], []>} : vector<16x32xf32>, vector<32x64xf32>, vector<16x64xf32> -> vector<16x64xf32>
    %cst_3 = arith.constant 0.000000e+00 : f32
    %3 = vector.broadcast %cst_3 : f32 to vector<16x64xf32>
    %4 = arith.maximumf %2, %3 : vector<16x64xf32>
    %c0_4 = arith.constant 0 : index
    %c0_5 = arith.constant 0 : index
    %5 = vector.load %arg3[%c0_4, %c0_5] : memref<64x32xf32, #tpu.memory_space<vmem>>, vector<64x32xf32>
    %cst_6 = arith.constant dense<0.000000e+00> : vector<16x32xf32>
    %6 = tpu.matmul %4, %5, %cst_6 {dimension_numbers = #tpu.dot_dimension_numbers<[1], [0], [0], [1], [0, 0, 1, 1], [], []>} : vector<16x64xf32>, vector<64x32xf32>, vector<16x32xf32> -> vector<16x32xf32>
    %7 = arith.addf %0, %6 : vector<16x32xf32>
    %cst_7 = arith.constant dense<0.000000e+00> : vector<16xf32>
    %8 = vector.multi_reduction <add>, %7, %cst_7 [1] : vector<16x32xf32> to vector<16xf32>
    %9 = vector.shape_cast %8 : vector<16xf32> to vector<16x1xf32>
    %cst_8 = arith.constant 3.200000e+01 : f32
    %10 = vector.broadcast %cst_8 : f32 to vector<16x1xf32>
    %11 = arith.divf %9, %10 : vector<16x1xf32>
    %12 = vector.broadcast %11 : vector<16x1xf32> to vector<16x32xf32>
    %13 = arith.subf %7, %12 : vector<16x32xf32>
    %14 = arith.mulf %13, %13 : vector<16x32xf32>
    %cst_9 = arith.constant dense<0.000000e+00> : vector<16xf32>
    %15 = vector.multi_reduction <add>, %14, %cst_9 [1] : vector<16x32xf32> to vector<16xf32>
    %16 = vector.shape_cast %15 : vector<16xf32> to vector<16x1xf32>
    %cst_10 = arith.constant 3.200000e+01 : f32
    %17 = vector.broadcast %cst_10 : f32 to vector<16x1xf32>
    %18 = arith.divf %16, %17 : vector<16x1xf32>
    %cst_11 = arith.constant 9.99999974E-6 : f32
    %19 = vector.broadcast %cst_11 : f32 to vector<16x1xf32>
    %20 = arith.addf %18, %19 : vector<16x1xf32>
    %21 = math.rsqrt %20 : vector<16x1xf32>
    %22 = vector.broadcast %21 : vector<16x1xf32> to vector<16x32xf32>
    %23 = arith.mulf %13, %22 : vector<16x32xf32>
    %c0_12 = arith.constant 0 : index
    %c0_13 = arith.constant 0 : index
    %24 = vector.load %arg4[%c0_12, %c0_13] : memref<16x32xf32, #tpu.memory_space<vmem>>, vector<16x32xf32>
    tpu.vector_store %arg4[%c0_12, %c0_13], %23 {strides = array<i32>} : memref<16x32xf32, #tpu.memory_space<vmem>>, vector<16x32xf32>,
    return
  }
  func.func @transform_0(%arg0: i32) -> (i32, i32) {
    %c0_i32 = arith.constant 0 : i32
    %c0_i32_0 = arith.constant 0 : i32
    return %arg0, %c0_i32 : i32, i32
  }
  func.func @transform_1(%arg0: i32) -> (i32, i32) {
    %c0_i32 = arith.constant 0 : i32
    %c0_i32_0 = arith.constant 0 : i32
    %c0_i32_1 = arith.constant 0 : i32
    return %c0_i32, %c0_i32_0 : i32, i32
  }
  func.func @transform_2(%arg0: i32) -> (i32, i32) {
    %c0_i32 = arith.constant 0 : i32
    %c0_i32_0 = arith.constant 0 : i32
    %c0_i32_1 = arith.constant 0 : i32
    return %c0_i32, %c0_i32_0 : i32, i32
  }
  func.func @transform_3(%arg0: i32) -> (i32, i32) {
    %c0_i32 = arith.constant 0 : i32
    %c0_i32_0 = arith.constant 0 : i32
    return %arg0, %c0_i32 : i32, i32
  }
}

</mosaic_0001>

<llo_original>
// kernel: tpu_custom_call.1
$region0: #{tpu_custom_call.1}
  #allocation0 [shape = 'u32[]', space=smem, size = 0x4, offset = 0x4, fixed_abs, tag = 'smem constant byte address 0x4 - core index']
  #allocation1 [shape = 'u32[144,128]{1,0:T(1,128)}', space=vmem, size = 0x12000, scoped, tag = 'internal scratch']
  %s0 = inlined_call_operand.vmem [shape: f32[16,32], index: 0, kind: input, shape index: {}]
  %s1 = inlined_call_operand.vmem [shape: f32[32,64], index: 1, kind: input, shape index: {}]
  %s2 = inlined_call_operand.vmem [shape: f32[64,32], index: 2, kind: input, shape index: {}]
  %s3 = inlined_call_operand.hbm [shape: f32[16,32], index: 3, kind: output, shape index: {}]
  %s4 = sld [smem:[#allocation0]]
  $region22: #{tpu_custom_call.1} parent=0
    _
  %s6 = ssub.s32 1, %s4
  %s7 = scalar_select 0, %s6, %s4
  $region1: #{tpu_custom_call.1} parent=0
    #allocation2 [shape = 'u8[8192]{0}', space=vmem, size = 0x2000, scoped, tag = 'output window, operand 0, single buffered']
    #allocation3 [shape = 's32[1]{0}', space=sflag, size = 0x4, scoped, tag = 'scoped memory for tpu_custom_call.1']
    %8 = vsyncpa [#allocation3], 0
    // Predicated region
    $region2: #{tpu_custom_call.1} parent=1 // pred_check
      _
    $region3: #{tpu_custom_call.1} parent=1 // pred_check_branch
      %10 = sbr.rel (0) target = $region5
    $region4: #{tpu_custom_call.1} parent=1 // pred_region
      _
    $region5: #{tpu_custom_call.1} parent=1 // pred_fallthru
      _
    // Predicated region
    $region6: #{tpu_custom_call.1} parent=1 // pred_check
      _
    $region7: #{tpu_custom_call.1} parent=1 // pred_check_branch
      %12 = sbr.rel (0) target = $region9
    $region8: #{tpu_custom_call.1} parent=1 // pred_region
      _
    $region9: #{tpu_custom_call.1} parent=1 // pred_fallthru
      _
    // Predicated region
    $region10: #{tpu_custom_call.1} parent=1 // pred_check
      _
    $region11: #{tpu_custom_call.1} parent=1 // pred_check_branch
      %14 = sbr.rel (0) target = $region13
    $region12: #{tpu_custom_call.1} parent=1 // pred_region
      _
    $region13: #{tpu_custom_call.1} parent=1 // pred_fallthru
      _
    %v15 = vld [vmem:[%s0] sm:$0xff]
    %v16 = vld [vmem:[%s0 + $0x8] sm:$0xff]
    %v17 = vld [vmem:[%s1] sm:$0xff]
    %v18 = vld [vmem:[%s1 + $0x8] sm:$0xff]
    %v19 = vld [vmem:[%s1 + $0x10] sm:$0xff]
    %v20 = vld [vmem:[%s1 + $0x18] sm:$0xff]
    %vm21 = vcmask 261120
    %v23 = vsel %vm21, %v15, 0
    %v26 = vsel %vm21, %v16, 0
    %28 = vmatprep.subr.mxu0 0.0
    %29 = vmatpush1.msra.mxu0 0.0
    %30 = vmatprep.subr.mxu0 0.0
    %31 = vmatpush1.msra.mxu0 0.0
    %32 = vmatprep.subr.mxu0 0.0
    %33 = vmatpush1.msra.mxu0 0.0
    %34 = vmatprep.subr.mxu0 0.0
    %35 = vmatpush1.msra.mxu0 0.0
    %36 = vmatprep.subr.mxu0 0.0
    %37 = vmatpush1.msra.mxu0 0.0
    %38 = vmatprep.subr.mxu0 0.0
    %39 = vmatpush1.msra.mxu0 0.0
    %40 = vmatprep.subr.mxu0 0.0
    %41 = vmatpush1.msra.mxu0 0.0
    %42 = vmatprep.subr.mxu0 0.0
    %43 = vmatpush1.msra.mxu0 0.0
    %44 = vmatprep.subr.mxu0 0.0
    %45 = vmatpush1.msra.mxu0 0.0
    %46 = vmatprep.subr.mxu0 0.0
    %47 = vmatpush1.msra.mxu0 0.0
    %48 = vmatprep.subr.mxu0 0.0
    %49 = vmatpush1.msra.mxu0 0.0
    %50 = vmatprep.subr.mxu0 0.0
    %51 = vmatpush1.msra.mxu0 0.0
    %52 = vmatprep.subr.mxu0 0.0
    %53 = vmatpush1.msra.mxu0 %v20
    %54 = vmatprep.subr.mxu0 0.0
    %55 = vmatpush1.msra.mxu0 %v19
    %56 = vmatprep.subr.mxu0 0.0
    %57 = vmatpush1.msra.mxu0 %v18
    %58 = vmatprep.subr.mxu0 0.0
    %59 = vmatpush1.msra.mxu0 %v17
    %60 = vmatprep.subr.mxu0 0.0
    %61 = vmatpush2.msra.mxu0 0.0
    %62 = vmatprep.subr.mxu0 0.0
    %63 = vmatpush2.msra.mxu0 0.0
    %64 = vmatprep.subr.mxu0 0.0
    %65 = vmatpush2.msra.mxu0 0.0
    %66 = vmatprep.subr.mxu0 0.0
    %67 = vmatpush2.msra.mxu0 0.0
    %68 = vmatprep.subr.mxu0 0.0
    %69 = vmatpush2.msra.mxu0 0.0
    %70 = vmatprep.subr.mxu0 0.0
    %71 = vmatpush2.msra.mxu0 0.0
    %72 = vmatprep.subr.mxu0 0.0
    %73 = vmatpush2.msra.mxu0 0.0
    %74 = vmatprep.subr.mxu0 0.0
    %75 = vmatpush2.msra.mxu0 0.0
    %76 = vmatprep.subr.mxu0 0.0
    %77 = vmatpush2.msra.mxu0 0.0
    %78 = vmatprep.subr.mxu0 0.0
    %79 = vmatpush2.msra.mxu0 0.0
    %80 = vmatprep.subr.mxu0 0.0
    %81 = vmatpush2.msra.mxu0 0.0
    %82 = vmatprep.subr.mxu0 0.0
    %83 = vmatpush2.msra.mxu0 0.0
    %84 = vmatprep.subr.mxu0 0.0
    %85 = vmatpush2.msra.mxu0 0.0
    %86 = vmatprep.subr.mxu0 0.0
    %87 = vmatpush2.msra.mxu0 0.0
    %88 = vmatprep.subr.mxu0 0.0
    %89 = vmatpush2.msra.mxu0 0.0
    %90 = vmatprep.subr.mxu0 0.0
    %91 = vmatpush2.msra.mxu0 0.0
    %92 = vmatprep.mubr.f32.mxu0 0.0
    %93 = vmatmul.mubr.f32.gmra.mxu0 %v23
    %v94 = vpop.f32.mrf.mxu0
    %v95 = vadd.f32 0.0, %v94
    %v96 = vpop.f32.mrf.mxu0
    %97 = vmatprep.mubr.f32.mxu0 0.0
    %98 = vmatmul.mubr.f32.gmra.mxu0 %v26
    %v99 = vpop.f32.mrf.mxu0
    %v100 = vadd.f32 0.0, %v99
    %v101 = vpop.f32.mrf.mxu0
    %102 = vdwg.mxu0
    %v103 = vmax.f32 %v95, 0.0
    %v104 = vmax.f32 %v100, 0.0
    %v105 = vld [vmem:[%s2] sm:$0xff]
    %v106 = vld [vmem:[%s2 + $0x8] sm:$0xff]
    %v107 = vld [vmem:[%s2 + $0x10] sm:$0xff]
    %v108 = vld [vmem:[%s2 + $0x18] sm:$0xff]
    %v109 = vld [vmem:[%s2 + $0x20] sm:$0xff]
    %v110 = vld [vmem:[%s2 + $0x28] sm:$0xff]
    %v111 = vld [vmem:[%s2 + $0x30] sm:$0xff]
    %v112 = vld [vmem:[%s2 + $0x38] sm:$0xff]
    %vm113 = vcmask 523264
    %v115 = vsel %vm113, %v103, 0
    %v118 = vsel %vm113, %v104, 0
    %120 = vmatprep.subr.mxu0 0.0
    %121 = vmatpush1.msra.mxu0 0.0
    %122 = vmatprep.subr.mxu0 0.0
    %123 = vmatpush1.msra.mxu0 0.0
    %124 = vmatprep.subr.mxu0 0.0
    %125 = vmatpush1.msra.mxu0 0.0
    %126 = vmatprep.subr.mxu0 0.0
    %127 = vmatpush1.msra.mxu0 0.0
    %128 = vmatprep.subr.mxu0 0.0
    %129 = vmatpush1.msra.mxu0 0.0
    %130 = vmatprep.subr.mxu0 0.0
    %131 = vmatpush1.msra.mxu0 0.0
    %132 = vmatprep.subr.mxu0 0.0
    %133 = vmatpush1.msra.mxu0 0.0
    %134 = vmatprep.subr.mxu0 0.0
    %135 = vmatpush1.msra.mxu0 0.0
    %136 = vmatprep.subr.mxu0 0.0
    %137 = vmatpush1.msra.mxu0 %v112
    %138 = vmatprep.subr.mxu0 0.0
    %139 = vmatpush1.msra.mxu0 %v111
    %140 = vmatprep.subr.mxu0 0.0
    %141 = vmatpush1.msra.mxu0 %v110
    %142 = vmatprep.subr.mxu0 0.0
    %143 = vmatpush1.msra.mxu0 %v109
    %144 = vmatprep.subr.mxu0 0.0
    %145 = vmatpush1.msra.mxu0 %v108
    %146 = vmatprep.subr.mxu0 0.0
    %147 = vmatpush1.msra.mxu0 %v107
    %148 = vmatprep.subr.mxu0 0.0
    %149 = vmatpush1.msra.mxu0 %v106
    %150 = vmatprep.subr.mxu0 0.0
    %151 = vmatpush1.msra.mxu0 %v105
    %152 = vmatprep.subr.mxu0 0.0
    %153 = vmatpush2.msra.mxu0 0.0
    %154 = vmatprep.subr.mxu0 0.0
    %155 = vmatpush2.msra.mxu0 0.0
    %156 = vmatprep.subr.mxu0 0.0
    %157 = vmatpush2.msra.mxu0 0.0
    %158 = vmatprep.subr.mxu0 0.0
    %159 = vmatpush2.msra.mxu0 0.0
    %160 = vmatprep.subr.mxu0 0.0
    %161 = vmatpush2.msra.mxu0 0.0
    %162 = vmatprep.subr.mxu0 0.0
    %163 = vmatpush2.msra.mxu0 0.0
    %164 = vmatprep.subr.mxu0 0.0
    %165 = vmatpush2.msra.mxu0 0.0
    %166 = vmatprep.subr.mxu0 0.0
    %167 = vmatpush2.msra.mxu0 0.0
    %168 = vmatprep.subr.mxu0 0.0
    %169 = vmatpush2.msra.mxu0 0.0
    %170 = vmatprep.subr.mxu0 0.0
    %171 = vmatpush2.msra.mxu0 0.0
    %172 = vmatprep.subr.mxu0 0.0
    %173 = vmatpush2.msra.mxu0 0.0
    %174 = vmatprep.subr.mxu0 0.0
    %175 = vmatpush2.msra.mxu0 0.0
    %176 = vmatprep.subr.mxu0 0.0
    %177 = vmatpush2.msra.mxu0 0.0
    %178 = vmatprep.subr.mxu0 0.0
    %179 = vmatpush2.msra.mxu0 0.0
    %180 = vmatprep.subr.mxu0 0.0
    %181 = vmatpush2.msra.mxu0 0.0
    %182 = vmatprep.subr.mxu0 0.0
    %183 = vmatpush2.msra.mxu0 0.0
    %184 = vmatprep.mubr.f32.mxu0 0.0
    %185 = vmatmul.mubr.f32.gmra.mxu0 %v115
    %v186 = vpop.f32.mrf.mxu0
    %v187 = vadd.f32 0.0, %v186
    %v188 = vpop.f32.mrf.mxu0
    %189 = vmatprep.mubr.f32.mxu0 0.0
    %190 = vmatmul.mubr.f32.gmra.mxu0 %v118
    %v191 = vpop.f32.mrf.mxu0
    %v192 = vadd.f32 0.0, %v191
    %v193 = vpop.f32.mrf.mxu0
    %194 = vdwg.mxu0
    %v195 = vadd.f32 %v15, %v187
    %v196 = vadd.f32 %v16, %v192
    %v197 = vsel %vm21, %v195, 0.0
    %198 = vadd.xlane.f32.xlu0 %v197
    %v199 = vpop.xlane.xlu0 %198
    %v200 = vsel %vm21, %v196, 0.0
    %201 = vadd.xlane.f32.xlu0 %v200
    %v202 = vpop.xlane.xlu0 %201
    %v203 = vrcp.pop 32.0
    %v204 = vmul.f32 %v199, %v203
    %v205 = vmul.f32 %v202, %v203
    %v206 = vsub.f32 %v195, %v204
    %v207 = vsub.f32 %v196, %v205
    %v208 = vmul.f32 %v206, %v206
    %v209 = vmul.f32 %v207, %v207
    %v210 = vsel %vm21, %v208, 0.0
    %211 = vadd.xlane.f32.xlu0 %v210
    %v212 = vpop.xlane.xlu0 %211
    %v213 = vsel %vm21, %v209, 0.0
    %214 = vadd.xlane.f32.xlu0 %v213
    %v215 = vpop.xlane.xlu0 %214
    %v216 = vmul.f32 %v212, %v203
    %v217 = vmul.f32 %v215, %v203
    %v218 = vadd.f32 %v216, 1e-05
    %v219 = vadd.f32 %v217, 1e-05
    %v220 = vrsqrt.pop %v218
    %v221 = vrsqrt.pop %v219
    %v222 = vmul.f32 %v206, %v220
    %v223 = vmul.f32 %v207, %v221
    %224 = vst.msk [vmem:[#allocation2] sm:$0xff] %vm21, %v222
    %225 = vst.msk [vmem:[#allocation2 + $0x8] sm:$0xff] %vm21, %v223
    // Predicated region
    $region14: #{tpu_custom_call.1} parent=1 // pred_check
      _
    $region15: #{tpu_custom_call.1} parent=1 // pred_check_branch
      %227 = sbr.rel (0) target = $region17
    $region16: #{tpu_custom_call.1} parent=1 // pred_region
      %s229 = ssub.s32 256, 256
      %230 = vsyncadd [#allocation3], %s229
      %s231 = sshll.u32 [#allocation2], 4
      %s232 = int_to_ptr.vmem [resolvable:$true] %s231
      %237 = dma.vmem_to_hbm [thread:$0]  %s232, 256, %s3, [#allocation3], 128, 128, 8
    $region17: #{tpu_custom_call.1} parent=1 // pred_fallthru
      _
    // Predicated region
    $region18: #{tpu_custom_call.1} parent=1 // pred_check
      _
    $region19: #{tpu_custom_call.1} parent=1 // pred_check_branch
      %239 = sbr.rel (0) target = $region21
    $region20: #{tpu_custom_call.1} parent=1 // pred_region
      %240 = dma.done [#allocation3], 256
    $region21: #{tpu_custom_call.1} parent=1 // pred_fallthru
      _
    %241 = vsyncpa [#allocation3], 1

</llo_original>
